<compile_context>
chip_gen: v6e
topology: v6e:2x2x1
jax: 0.10.0
libtpu: 0.0.40
codegen_flags: <defaults>
</compile_context>

<pallas_src>
import functools

import numpy as np
import jax
import jax.numpy as jnp
from jax.experimental import pallas as pl
from jax.experimental.pallas import tpu as pltpu

_LANES = 128
_ROW_ALIGN = 32          # TR multiple: safe sublane packing for f32 / bf16 / f16
_SMALL_N_FALLBACK = 65536


def _device_kind():
    try:
        return jax.devices()[0].device_kind.lower()
    except Exception:
        return ""


def _num_parallel_partials():
    # One partial per TensorCore.  v5e / v6e expose a single TC per chip, so an extra
    # partial only adds an output-block changeover; v4 / v5p / v7x have 2 cores that the
    # "parallel" grid axis can shard across.
    kind = _device_kind()
    single_tc = any(s in kind for s in ("v5e", "v5 lite", "v5litepod", "v6e", "v6 lite"))
    return 1 if single_tc else 2


def _tr_cap():
    # Per-generation VMEM budget for the double-buffered input pipeline (f32 worst case):
    #   block bytes/input = 6 * TR * 128 * 4;  x 2 inputs x 2 pipeline buffers.
    kind = _device_kind()
    if ("v6" in kind) or ("v7" in kind):
        return 2048   # 24 MiB total < 32 MiB scoped default (v7x physical is 64 MiB/TC)
    return 1024       # 12 MiB total < v5e's 16 MiB scoped default; safe fallback elsewhere


def _iou_loss_kernel(p_ref, t_ref, out_ref, *, eps):
    # out_ref block index depends only on the parallel axis -> resident accumulator
    # across the reduction axis; zero it on the first reduction step.
    @pl.when(pl.program_id(1) == 0)
    def _():
        out_ref[...] = jnp.zeros_like(out_ref)

    # p_ref/t_ref: (6, TR, 128) in the input dtype — index out dense coordinate planes
    # and cast to f32 in-vreg (keeps HBM traffic narrow for bf16/f16 inputs).
    def plane(ref, c):
        return ref[c].astype(jnp.float32)

    px1, py1, pz1, px2, py2, pz2 = (plane(p_ref, c) for c in range(6))
    tx1, ty1, tz1, tx2, ty2, tz2 = (plane(t_ref, c) for c in range(6))

    # volumes
    vol_p = (px2 - px1) * (py2 - py1) * (pz2 - pz1)
    vol_t = (tx2 - tx1) * (ty2 - ty1) * (tz2 - tz1)

    # aligned intersection: clamp(min(rb) - max(lt), 0) per axis
    whx = jnp.maximum(jnp.minimum(px2, tx2) - jnp.maximum(px1, tx1), 0.0)
    why = jnp.maximum(jnp.minimum(py2, ty2) - jnp.maximum(py1, ty1), 0.0)
    whz = jnp.maximum(jnp.minimum(pz2, tz2) - jnp.maximum(pz1, tz1), 0.0)
    overlap = whx * why * whz

    union = jnp.maximum(vol_p + vol_t - overlap, eps)
    loss = 1.0 - overlap / union                      # (TR, 128); pad lanes are exactly 0

    # Fold the TR sublane-rows into an (8, 128) lane-dense partial (pure VPU adds,
    # no cross-lane reduce inside the kernel) and accumulate.
    tr = loss.shape[0]
    partial = loss.reshape(tr // 8, 8, _LANES).sum(axis=0)   # (8, 128)
    out_ref[...] += partial[None, :, :]


def _reference_loss(pred, target, eps=1e-6):
    """Pure-JAX reference matching the PyTorch semantics (also the small-n fast path)."""
    pred = jnp.asarray(pred, jnp.float32)
    target = jnp.asarray(target, jnp.float32)
    area1 = (pred[..., 3] - pred[..., 0]) * (pred[..., 4] - pred[..., 1]) * (pred[..., 5] - pred[..., 2])
    area2 = (target[..., 3] - target[..., 0]) * (target[..., 4] - target[..., 1]) * (target[..., 5] - target[..., 2])
    lt = jnp.maximum(pred[..., :3], target[..., :3])
    rb = jnp.minimum(pred[..., 3:], target[..., 3:])
    wh = jnp.maximum(rb - lt, 0.0)
    overlap = wh[..., 0] * wh[..., 1] * wh[..., 2]
    union = jnp.maximum(area1 + area2 - overlap, eps)
    iou = overlap / union
    return jnp.mean(1.0 - iou)


def axis_aligned_iou_loss2(pred, target, *, loss_weight=1.0, eps=1e-6, force_pallas=False):
    """Equivalent of AxisAlignedIoULoss2(mode='iou', reduction='mean').forward(pred, target)."""
    assert pred.shape == target.shape
    assert pred.shape[-1] == 6
    n = int(np.prod(pred.shape[:-1]))
    assert n > 0, "empty input not supported"

    pred = jnp.asarray(pred)
    target = jnp.asarray(target)
    dt = jnp.promote_types(pred.dtype, target.dtype)
    if not jnp.issubdtype(dt, jnp.floating):
        dt = jnp.float32

    # Small inputs: the fixed pallas launch + padding/relayout overhead dominates; use
    # the fused pure-JAX path instead.
    if (n < _SMALL_N_FALLBACK) and not force_pallas:
        return _reference_loss(pred.astype(dt), target.astype(dt), eps=eps) * float(loss_weight)

    p_n = _num_parallel_partials()
    cap = _tr_cap()

    # tile sizing: TR sublane-rows of 128 boxes per grid step, 32-row aligned, capped per
    # generation so 2 inputs x 2 pipeline buffers stay inside the scoped-VMEM default.
    r = pl.cdiv(n, _LANES)                                              # rows of 128 boxes
    tr = max(_ROW_ALIGN, min(cap, _ROW_ALIGN * pl.cdiv(pl.cdiv(r, p_n), _ROW_ALIGN)))
    s = pl.cdiv(r, tr * p_n)                                            # reduction steps per partial
    rpad = p_n * s * tr
    npad = rpad * _LANES

    # pad with IDENTICAL unit boxes [0,0,0,1,1,1] for pred and target:
    # iou == 1 exactly -> loss contribution 0, so no masking is needed in the kernel.
    unit_box = jnp.array([0.0, 0.0, 0.0, 1.0, 1.0, 1.0], dt)

    def to_planar(x):
        x = x.astype(dt).reshape(n, 6)
        if npad > n:
            pad = jnp.broadcast_to(unit_box, (npad - n, 6))
            x = jnp.concatenate([x, pad], axis=0)
        return x.T.reshape(6, rpad, _LANES)              # coordinate-planar layout

    p = to_planar(pred)
    t = to_planar(target)

    box_spec = pl.BlockSpec((6, tr, _LANES), lambda pi, si: (0, pi * s + si, 0))

    itemsize = jnp.dtype(dt).itemsize
    cost = pl.CostEstimate(
        flops=30 * npad,
        transcendentals=0,
        bytes_accessed=2 * 6 * npad * itemsize + p_n * 8 * _LANES * 4,
    )

    partials = pl.pallas_call(
        functools.partial(_iou_loss_kernel, eps=float(eps)),
        out_shape=jax.ShapeDtypeStruct((p_n, 8, _LANES), jnp.float32),
        grid=(p_n, s),
        in_specs=[box_spec, box_spec],
        out_specs=pl.BlockSpec((1, 8, _LANES), lambda pi, si: (pi, 0, 0)),
        compiler_params=pltpu.CompilerParams(
            dimension_semantics=("parallel", "arbitrary"),
            allow_input_fusion=[True, True]),   # let XLA fuse pad/transpose into operands
        cost_estimate=cost,
    )(p, t)

    # final reduction over P * 8 * 128 partial-sum slots + mean/weight scaling.
    return jnp.sum(partials) * (float(loss_weight) / float(n))


if __name__ == "__main__":
    key = jax.random.PRNGKey(0)
    k1, k2, k3, k4 = jax.random.split(key, 4)

    B, M = 2, 16  # pred/target shape [..., 6] -> (2, 16, 6)
    # build well-formed boxes: corner + positive size
    p_lo = jax.random.uniform(k1, (B, M, 3), minval=0.0, maxval=10.0)
    p_sz = jax.random.uniform(k2, (B, M, 3), minval=0.5, maxval=5.0)
    t_lo = jax.random.uniform(k3, (B, M, 3), minval=0.0, maxval=10.0)
    t_sz = jax.random.uniform(k4, (B, M, 3), minval=0.5, maxval=5.0)
    pred = jnp.concatenate([p_lo, p_lo + p_sz], axis=-1)    # (2, 16, 6) f32
    target = jnp.concatenate([t_lo, t_lo + t_sz], axis=-1)  # (2, 16, 6) f32

    # force the Pallas path (demo shapes would otherwise take the small-n fast path)
    loss_fn = jax.jit(functools.partial(axis_aligned_iou_loss2, force_pallas=True))

    # f32 path
    loss = jax.block_until_ready(loss_fn(pred, target))
    ref = jax.block_until_ready(_reference_loss(pred, target))
    np.testing.assert_allclose(np.asarray(loss), np.asarray(ref), rtol=1e-5, atol=1e-5)

    # bf16 path (narrow dtype kept through HBM; cast to f32 inside the kernel)
    pred_bf = pred.astype(jnp.bfloat16)
    target_bf = target.astype(jnp.bfloat16)
    loss_bf = jax.block_until_ready(loss_fn(pred_bf, target_bf))
    ref_bf = jax.block_until_ready(_reference_loss(pred_bf, target_bf))
    np.testing.assert_allclose(np.asarray(loss_bf), np.asarray(ref_bf), rtol=1e-4, atol=1e-4)

    print("KERNEL_OK")
</pallas_src>

<mosaic_0001>
module attributes {stable_mosaic.version = 11 : i64} {
  func.func @_iou_loss_kernel(%arg0: i32, %arg1: i32, %arg2: memref<6x32x128xf32, #tpu.memory_space<vmem>>, %arg3: memref<6x32x128xf32, #tpu.memory_space<vmem>>, %arg4: memref<1x8x128xf32, #tpu.memory_space<vmem>>) attributes {dimension_semantics = [#tpu.dimension_semantics<parallel>, #tpu.dimension_semantics<arbitrary>], iteration_bounds = array<i64: 2, 1>, scalar_prefetch = 0 : i64, scratch_operands = 0 : i64, tpu.core_type = #tpu.core_type<tc>, window_params = [{transform_indices = @transform_0, window_bounds = array<i64: 6, 32, 128>}, {transform_indices = @transform_1, window_bounds = array<i64: 6, 32, 128>}, {transform_indices = @transform_2, window_bounds = array<i64: 1, 8, 128>}]} {
    %c0_i32 = arith.constant 0 : i32
    %0 = arith.cmpi eq, %arg1, %c0_i32 : i32
    %1 = arith.extui %0 : i1 to i32
    %c0_i32_0 = arith.constant 0 : i32
    %2 = arith.cmpi ne, %1, %c0_i32_0 : i32
    scf.if %2 {
      %cst_42 = arith.constant 0.000000e+00 : f32
      %67 = vector.broadcast %cst_42 : f32 to vector<1x8x128xf32>
      %c0_43 = arith.constant 0 : index
      %c0_44 = arith.constant 0 : index
      %c0_45 = arith.constant 0 : index
      %68 = vector.load %arg4[%c0_43, %c0_44, %c0_45] : memref<1x8x128xf32, #tpu.memory_space<vmem>>, vector<1x8x128xf32>
      tpu.vector_store %arg4[%c0_43, %c0_44, %c0_45], %67 {strides = array<i32>} : memref<1x8x128xf32, #tpu.memory_space<vmem>>, vector<1x8x128xf32>,
    } else {
    }
    %c0 = arith.constant 0 : index
    %c0_1 = arith.constant 0 : index
    %c0_2 = arith.constant 0 : index
    %3 = vector.load %arg2[%c0, %c0_1, %c0_2] : memref<6x32x128xf32, #tpu.memory_space<vmem>>, vector<1x32x128xf32>
    %4 = vector.shape_cast %3 : vector<1x32x128xf32> to vector<32x128xf32>
    %c1 = arith.constant 1 : index
    %c0_3 = arith.constant 0 : index
    %c0_4 = arith.constant 0 : index
    %5 = vector.load %arg2[%c1, %c0_3, %c0_4] : memref<6x32x128xf32, #tpu.memory_space<vmem>>, vector<1x32x128xf32>
    %6 = vector.shape_cast %5 : vector<1x32x128xf32> to vector<32x128xf32>
    %c2 = arith.constant 2 : index
    %c0_5 = arith.constant 0 : index
    %c0_6 = arith.constant 0 : index
    %7 = vector.load %arg2[%c2, %c0_5, %c0_6] : memref<6x32x128xf32, #tpu.memory_space<vmem>>, vector<1x32x128xf32>
    %8 = vector.shape_cast %7 : vector<1x32x128xf32> to vector<32x128xf32>
    %c3 = arith.constant 3 : index
    %c0_7 = arith.constant 0 : index
    %c0_8 = arith.constant 0 : index
    %9 = vector.load %arg2[%c3, %c0_7, %c0_8] : memref<6x32x128xf32, #tpu.memory_space<vmem>>, vector<1x32x128xf32>
    %10 = vector.shape_cast %9 : vector<1x32x128xf32> to vector<32x128xf32>
    %c4 = arith.constant 4 : index
    %c0_9 = arith.constant 0 : index
    %c0_10 = arith.constant 0 : index
    %11 = vector.load %arg2[%c4, %c0_9, %c0_10] : memref<6x32x128xf32, #tpu.memory_space<vmem>>, vector<1x32x128xf32>
    %12 = vector.shape_cast %11 : vector<1x32x128xf32> to vector<32x128xf32>
    %c5 = arith.constant 5 : index
    %c0_11 = arith.constant 0 : index
    %c0_12 = arith.constant 0 : index
    %13 = vector.load %arg2[%c5, %c0_11, %c0_12] : memref<6x32x128xf32, #tpu.memory_space<vmem>>, vector<1x32x128xf32>
    %14 = vector.shape_cast %13 : vector<1x32x128xf32> to vector<32x128xf32>
    %c0_13 = arith.constant 0 : index
    %c0_14 = arith.constant 0 : index
    %c0_15 = arith.constant 0 : index
    %15 = vector.load %arg3[%c0_13, %c0_14, %c0_15] : memref<6x32x128xf32, #tpu.memory_space<vmem>>, vector<1x32x128xf32>
    %16 = vector.shape_cast %15 : vector<1x32x128xf32> to vector<32x128xf32>
    %c1_16 = arith.constant 1 : index
    %c0_17 = arith.constant 0 : index
    %c0_18 = arith.constant 0 : index
    %17 = vector.load %arg3[%c1_16, %c0_17, %c0_18] : memref<6x32x128xf32, #tpu.memory_space<vmem>>, vector<1x32x128xf32>
    %18 = vector.shape_cast %17 : vector<1x32x128xf32> to vector<32x128xf32>
    %c2_19 = arith.constant 2 : index
    %c0_20 = arith.constant 0 : index
    %c0_21 = arith.constant 0 : index
    %19 = vector.load %arg3[%c2_19, %c0_20, %c0_21] : memref<6x32x128xf32, #tpu.memory_space<vmem>>, vector<1x32x128xf32>
    %20 = vector.shape_cast %19 : vector<1x32x128xf32> to vector<32x128xf32>
    %c3_22 = arith.constant 3 : index
    %c0_23 = arith.constant 0 : index
    %c0_24 = arith.constant 0 : index
    %21 = vector.load %arg3[%c3_22, %c0_23, %c0_24] : memref<6x32x128xf32, #tpu.memory_space<vmem>>, vector<1x32x128xf32>
    %22 = vector.shape_cast %21 : vector<1x32x128xf32> to vector<32x128xf32>
    %c4_25 = arith.constant 4 : index
    %c0_26 = arith.constant 0 : index
    %c0_27 = arith.constant 0 : index
    %23 = vector.load %arg3[%c4_25, %c0_26, %c0_27] : memref<6x32x128xf32, #tpu.memory_space<vmem>>, vector<1x32x128xf32>
    %24 = vector.shape_cast %23 : vector<1x32x128xf32> to vector<32x128xf32>
    %c5_28 = arith.constant 5 : index
    %c0_29 = arith.constant 0 : index
    %c0_30 = arith.constant 0 : index
    %25 = vector.load %arg3[%c5_28, %c0_29, %c0_30] : memref<6x32x128xf32, #tpu.memory_space<vmem>>, vector<1x32x128xf32>
    %26 = vector.shape_cast %25 : vector<1x32x128xf32> to vector<32x128xf32>
    %27 = arith.subf %10, %4 : vector<32x128xf32>
    %28 = arith.subf %12, %6 : vector<32x128xf32>
    %29 = arith.mulf %27, %28 : vector<32x128xf32>
    %30 = arith.subf %14, %8 : vector<32x128xf32>
    %31 = arith.mulf %29, %30 : vector<32x128xf32>
    %32 = arith.subf %22, %16 : vector<32x128xf32>
    %33 = arith.subf %24, %18 : vector<32x128xf32>
    %34 = arith.mulf %32, %33 : vector<32x128xf32>
    %35 = arith.subf %26, %20 : vector<32x128xf32>
    %36 = arith.mulf %34, %35 : vector<32x128xf32>
    %37 = arith.minimumf %10, %22 : vector<32x128xf32>
    %38 = arith.maximumf %4, %16 : vector<32x128xf32>
    %39 = arith.subf %37, %38 : vector<32x128xf32>
    %cst = arith.constant 0.000000e+00 : f32
    %40 = vector.broadcast %cst : f32 to vector<32x128xf32>
    %41 = arith.maximumf %39, %40 : vector<32x128xf32>
    %42 = arith.minimumf %12, %24 : vector<32x128xf32>
    %43 = arith.maximumf %6, %18 : vector<32x128xf32>
    %44 = arith.subf %42, %43 : vector<32x128xf32>
    %cst_31 = arith.constant 0.000000e+00 : f32
    %45 = vector.broadcast %cst_31 : f32 to vector<32x128xf32>
    %46 = arith.maximumf %44, %45 : vector<32x128xf32>
    %47 = arith.minimumf %14, %26 : vector<32x128xf32>
    %48 = arith.maximumf %8, %20 : vector<32x128xf32>
    %49 = arith.subf %47, %48 : vector<32x128xf32>
    %cst_32 = arith.constant 0.000000e+00 : f32
    %50 = vector.broadcast %cst_32 : f32 to vector<32x128xf32>
    %51 = arith.maximumf %49, %50 : vector<32x128xf32>
    %52 = arith.mulf %41, %46 : vector<32x128xf32>
    %53 = arith.mulf %52, %51 : vector<32x128xf32>
    %54 = arith.addf %31, %36 : vector<32x128xf32>
    %55 = arith.subf %54, %53 : vector<32x128xf32>
    %cst_33 = arith.constant 9.99999997E-7 : f32
    %56 = vector.broadcast %cst_33 : f32 to vector<32x128xf32>
    %57 = arith.maximumf %55, %56 : vector<32x128xf32>
    %58 = arith.divf %53, %57 : vector<32x128xf32>
    %cst_34 = arith.constant 1.000000e+00 : f32
    %59 = vector.broadcast %cst_34 : f32 to vector<32x128xf32>
    %60 = arith.subf %59, %58 : vector<32x128xf32>
    %61 = vector.shape_cast %60 : vector<32x128xf32> to vector<4x8x128xf32>
    %cst_35 = arith.constant dense<0.000000e+00> : vector<8x128xf32>
    %62 = vector.multi_reduction <add>, %61, %cst_35 [0] : vector<4x8x128xf32> to vector<8x128xf32>
    %c0_36 = arith.constant 0 : index
    %c0_37 = arith.constant 0 : index
    %c0_38 = arith.constant 0 : index
    %63 = vector.load %arg4[%c0_36, %c0_37, %c0_38] : memref<1x8x128xf32, #tpu.memory_space<vmem>>, vector<1x8x128xf32>
    %64 = vector.shape_cast %62 : vector<8x128xf32> to vector<1x8x128xf32>
    %65 = arith.addf %63, %64 : vector<1x8x128xf32>
    %c0_39 = arith.constant 0 : index
    %c0_40 = arith.constant 0 : index
    %c0_41 = arith.constant 0 : index
    %66 = vector.load %arg4[%c0_39, %c0_40, %c0_41] : memref<1x8x128xf32, #tpu.memory_space<vmem>>, vector<1x8x128xf32>
    tpu.vector_store %arg4[%c0_39, %c0_40, %c0_41], %65 {strides = array<i32>} : memref<1x8x128xf32, #tpu.memory_space<vmem>>, vector<1x8x128xf32>,
    return
  }
  func.func @transform_0(%arg0: i32, %arg1: i32) -> (i32, i32, i32) {
    %c1_i32 = arith.constant 1 : i32
    %0 = arith.muli %arg0, %c1_i32 : i32
    %1 = arith.addi %0, %arg1 : i32
    %c0_i32 = arith.constant 0 : i32
    %c0_i32_0 = arith.constant 0 : i32
    %c0_i32_1 = arith.constant 0 : i32
    return %c0_i32, %1, %c0_i32_0 : i32, i32, i32
  }
  func.func @transform_1(%arg0: i32, %arg1: i32) -> (i32, i32, i32) {
    %c1_i32 = arith.constant 1 : i32
    %0 = arith.muli %arg0, %c1_i32 : i32
    %1 = arith.addi %0, %arg1 : i32
    %c0_i32 = arith.constant 0 : i32
    %c0_i32_0 = arith.constant 0 : i32
    %c0_i32_1 = arith.constant 0 : i32
    return %c0_i32, %1, %c0_i32_0 : i32, i32, i32
  }
  func.func @transform_2(%arg0: i32, %arg1: i32) -> (i32, i32, i32) {
    %c0_i32 = arith.constant 0 : i32
    %c0_i32_0 = arith.constant 0 : i32
    %c0_i32_1 = arith.constant 0 : i32
    return %arg0, %c0_i32, %c0_i32_0 : i32, i32, i32
  }
}

</mosaic_0001>

<llo_original>
// kernel: axis_aligned_iou_loss2.2
$region0: #{axis_aligned_iou_loss2.2}
  #allocation0 [shape = 'u32[]', space=smem, size = 0x4, offset = 0x4, fixed_abs, tag = 'smem constant byte address 0x4 - core index']
  #allocation1 [shape = 'u32[144,128]{1,0:T(1,128)}', space=vmem, size = 0x12000, scoped, tag = 'internal scratch']
  %s0 = inlined_call_operand.vmem [shape: f32[1,6,64,128], index: 0, kind: input, shape index: {}]
  %s1 = inlined_call_operand.vmem [shape: f32[1,6,64,128], index: 1, kind: input, shape index: {}]
  %s2 = inlined_call_operand.vmem [shape: f32[2,8,128], index: 2, kind: output, shape index: {}]
  %s3 = sld [smem:[#allocation0]]
  $region45: #{axis_aligned_iou_loss2.2} parent=0
    _
  %s5 = ssub.s32 1, %s3
  %s6 = scalar_select 0, %s5, %s3
  loop: start=0, step=1, limit=4
  $region2: #{axis_aligned_iou_loss2.2} parent=0 // loop_pre_header
    _
  $region3: #{axis_aligned_iou_loss2.2} parent=0 // loop_header
    %s8 = sphi 0, %s12
    %p9 = scmp.ge.s32.totalorder %s8, 4
    %s15 = sphi 0, %s27
    %s16 = sphi 0, %s23
    %s17 = sphi 0, %s15
    %s18 = sphi 0, %s16
    %s19 = sphi 0, %s17
    %s20 = sphi 0, %s18
    %s32 = sphi 0, %s34
    %s35 = sphi 0, %s32
    %s36 = sphi 0, %s35
    %s52 = sphi 0, %s36
    %s60 = sphi 0, %s62
    %s63 = sphi 0, %s60
    %s64 = sphi 0, %s63
    %s80 = sphi 0, %s64
    %s86 = sphi 0, %s88
    %s89 = sphi 0, %s86
    %s90 = sphi 0, %s89
    %s106 = sphi 0, %s90
  $region4: #{axis_aligned_iou_loss2.2} parent=0 // loop_header_branch
    %11 = sbr.rel (%p9) target = $region8
  $region5: #{axis_aligned_iou_loss2.2} parent=0 // loop_body
    %s13 = ssub.s32 %s8, 1
    %s14 = ssub.s32 %s8, 2
    %s21 = sadd.s32 1, %s16
    %p22 = scmp.ge.s32.totalorder %s21, 1
    %s23 = scalar_select %p22, 0, %s21
    %s24 = sadd.s32 1, %s15
    %s25 = scalar_select %p22, %s24, %s15
    %p26 = scmp.ge.s32.totalorder %s25, 2
    %s27 = scalar_select %p26, 0, %s25
    %s28 = sadd.s32 %s15, %s16
    %s29 = sadd.s32 %s27, %s23
    %s30 = ssub.s32 %s28, %s29
    %p31 = scmp.eq.s32.totalorder %s30, 0
    %s33 = sadd.s32 %s32, 1
    %s34 = scalar_select %p31, %s32, %s33
    %p37 = pneg %p31
    %p38 = scmp.eq.s32.totalorder %s8, 1
    %p39 = por %p37, %p38
    %p40 = scmp.ne.s32.totalorder %s32, %s35
    %p41 = scmp.eq.s32.totalorder %s8, 0
    %p42 = por %p40, %p41
    %p43 = scmp.ne.s32.totalorder %s32, %s35
    %p44 = scmp.eq.s32.totalorder %s13, 1
    %p45 = por %p43, %p44
    %p46 = scmp.ne.s32.totalorder %s35, %s36
    %p47 = scmp.eq.s32.totalorder %s13, 0
    %p48 = por %p46, %p47
    %p49 = scmp.ne.s32.totalorder %s35, %s36
    %p50 = scmp.eq.s32.totalorder %s14, 1
    %p51 = por %p49, %p50
    %p53 = scmp.ne.s32.totalorder %s36, %s52
    %p54 = scmp.eq.s32.totalorder %s14, 0
    %p55 = por %p53, %p54
    %s56 = sadd.s32 %s15, %s16
    %s57 = sadd.s32 %s27, %s23
    %s58 = ssub.s32 %s56, %s57
    %p59 = scmp.eq.s32.totalorder %s58, 0
    %s61 = sadd.s32 %s60, 1
    %s62 = scalar_select %p59, %s60, %s61
    %p65 = pneg %p59
    %p66 = scmp.eq.s32.totalorder %s8, 1
    %p67 = por %p65, %p66
    %p68 = scmp.ne.s32.totalorder %s60, %s63
    %p69 = scmp.eq.s32.totalorder %s8, 0
    %p70 = por %p68, %p69
    %p71 = scmp.ne.s32.totalorder %s60, %s63
    %p72 = scmp.eq.s32.totalorder %s13, 1
    %p73 = por %p71, %p72
    %p74 = scmp.ne.s32.totalorder %s63, %s64
    %p75 = scmp.eq.s32.totalorder %s13, 0
    %p76 = por %p74, %p75
    %p77 = scmp.ne.s32.totalorder %s63, %s64
    %p78 = scmp.eq.s32.totalorder %s14, 1
    %p79 = por %p77, %p78
    %p81 = scmp.ne.s32.totalorder %s64, %s80
    %p82 = scmp.eq.s32.totalorder %s14, 0
    %p83 = por %p81, %p82
    %s84 = ssub.s32 %s15, %s27
    %p85 = scmp.eq.s32.totalorder %s84, 0
    %s87 = sadd.s32 %s86, 1
    %s88 = scalar_select %p85, %s86, %s87
    %p91 = pneg %p85
    %p92 = scmp.eq.s32.totalorder %s8, 1
    %p93 = por %p91, %p92
    %p94 = scmp.ne.s32.totalorder %s86, %s89
    %p95 = scmp.eq.s32.totalorder %s8, 0
    %p96 = por %p94, %p95
    %p97 = scmp.ne.s32.totalorder %s86, %s89
    %p98 = scmp.eq.s32.totalorder %s13, 1
    %p99 = por %p97, %p98
    %p100 = scmp.ne.s32.totalorder %s89, %s90
    %p101 = scmp.eq.s32.totalorder %s13, 0
    %p102 = por %p100, %p101
    %p103 = scmp.ne.s32.totalorder %s89, %s90
    %p104 = scmp.eq.s32.totalorder %s14, 1
    %p105 = por %p103, %p104
    %p107 = scmp.ne.s32.totalorder %s90, %s106
    %p108 = scmp.eq.s32.totalorder %s14, 0
    %p109 = por %p107, %p108
    %p110 = scmp.le.s32.totalorder 1, %s8
    %p111 = scmp.lt.s32.totalorder %s8, 3
    %p112 = pnand %p110, %p111
    %p113 = pneg %p112
    // Predicated region
    $region9: #{axis_aligned_iou_loss2.2} parent=5 // pred_check
      _
    $region10: #{axis_aligned_iou_loss2.2} parent=5 // pred_check_branch
      %115 = sbr.rel (%p112) target = $region12
    $region11: #{axis_aligned_iou_loss2.2} parent=5 // pred_region
      %s116 = ssub.s32 %s8, 1
    $region12: #{axis_aligned_iou_loss2.2} parent=5 // pred_fallthru
      _
    %p117 = scmp.lt.s32.totalorder %s8, 2
    // Predicated region
    $region13: #{axis_aligned_iou_loss2.2} parent=5 // pred_check
      %p118 = pneg %p117
    $region14: #{axis_aligned_iou_loss2.2} parent=5 // pred_check_branch
      %120 = sbr.rel (%p118) target = $region16
    $region15: #{axis_aligned_iou_loss2.2} parent=5 // pred_region
      // Predicated region
      $region17: #{axis_aligned_iou_loss2.2} parent=15 // pred_check
        %p121 = pneg %p42
      $region18: #{axis_aligned_iou_loss2.2} parent=15 // pred_check_branch
        %123 = sbr.rel (%p121) target = $region20
      $region19: #{axis_aligned_iou_loss2.2} parent=15 // pred_region
        %s124 = sadd.s32 %s15, %s16
        %s125 = smul.u32 4, %s124
        %p126 = scmp.lt.s32.totalorder %s125, 7
        %s127 = scalar_select %p126, %s125, 7
        %s128 = smul.addr %s127, 8
        %s129 = scalar_lea.vmem %s1, %s128
        %s130 = sadd.s32 %s15, %s16
        %s131 = smul.u32 4, %s130
      $region20: #{axis_aligned_iou_loss2.2} parent=15 // pred_fallthru
        _
      // Predicated region
      $region21: #{axis_aligned_iou_loss2.2} parent=15 // pred_check
        %p132 = pneg %p70
      $region22: #{axis_aligned_iou_loss2.2} parent=15 // pred_check_branch
        %134 = sbr.rel (%p132) target = $region24
      $region23: #{axis_aligned_iou_loss2.2} parent=15 // pred_region
        %s135 = sadd.s32 %s15, %s16
        %s136 = smul.u32 4, %s135
        %p137 = scmp.lt.s32.totalorder %s136, 7
        %s138 = scalar_select %p137, %s136, 7
        %s139 = smul.addr %s138, 8
        %s140 = scalar_lea.vmem %s0, %s139
        %s141 = sadd.s32 %s15, %s16
        %s142 = smul.u32 4, %s141
      $region24: #{axis_aligned_iou_loss2.2} parent=15 // pred_fallthru
        _
    $region16: #{axis_aligned_iou_loss2.2} parent=5 // pred_fallthru
      _
    %p143 = scmp.le.s32.totalorder 1, %s8
    %p144 = scmp.lt.s32.totalorder %s8, 3
    %p145 = pnand %p143, %p144
    %p146 = pneg %p145
    // Predicated region
    $region25: #{axis_aligned_iou_loss2.2} parent=5 // pred_check
      _
    $region26: #{axis_aligned_iou_loss2.2} parent=5 // pred_check_branch
      %148 = sbr.rel (%p145) target = $region28
    $region27: #{axis_aligned_iou_loss2.2} parent=5 // pred_region
      #allocation2 [shape = 'u8[98304]{0}', space=vmem, size = 0x18000, dematerialized = true, scoped, tag = 'FusionAdapter Buffer %fusion.4 = f32[6,64,128]{2,1,0:T(8,128)} fusion(%param_1.14), kind=kLoop, calls=%fused_computation.6.clone, metadata={op_name="jit(axis_aligned_iou_loss2)/reshape" stack_frame_id=12}']
      #allocation3 [shape = 'u8[98304]{0}', space=vmem, size = 0x18000, dematerialized = true, scoped, tag = 'FusionAdapter Buffer %fusion.3 = f32[6,64,128]{2,1,0:T(8,128)} fusion(%param_0.12), kind=kLoop, calls=%fused_computation.5.clone, metadata={op_name="jit(axis_aligned_iou_loss2)/reshape" stack_frame_id=17}']
      %s149 = ssub.s32 %s8, 1
      %s150 = sadd.s32 %s17, %s18
      %s151 = smul.u32 4, %s150
      %p152 = scmp.lt.s32.totalorder %s151, 7
      %s153 = scalar_select %p152, %s151, 7
      %s154 = smul.addr %s153, 8
      %s155 = scalar_lea.vmem %s1, %s154
      %p156 = pneg %p48
      %p157 = pneg %p45
      %s158 = sadd.s32 %s17, %s18
      %s159 = smul.u32 4, %s158
      %p160 = scmp.lt.s32.totalorder %s159, 7
      %s161 = scalar_select %p160, %s159, 7
      %s162 = smul.addr %s161, 8
      %s163 = scalar_lea.vmem %s0, %s162
      %p164 = pneg %p76
      %p165 = pneg %p73
      %p166 = pneg %p102
      %p167 = pneg %p99
      %p168 = scmp.lt.s32.totalorder %s17, 1
      %s169 = scalar_select %p168, %s17, 1
      %s170 = smul.addr %s169, 8
      %s171 = scalar_lea.vmem %s2, %s170
      %s172 = sadd.s32 %s17, %s18
      %s173 = smul.u32 4, %s172
      %p174 = scmp.lt.s32.totalorder %s173, 7
      %s175 = scalar_select %p174, %s173, 7
      %s176 = smul.addr %s175, 8
      %s177 = scalar_lea.vmem %s1, %s176
      %s178 = sadd.s32 %s17, %s18
      %s179 = smul.u32 4, %s178
      %s180 = sadd.s32 %s17, %s18
      %s181 = smul.u32 4, %s180
      %p182 = scmp.lt.s32.totalorder %s181, 7
      %s183 = scalar_select %p182, %s181, 7
      %s184 = smul.addr %s183, 8
      %s185 = scalar_lea.vmem %s0, %s184
      %s186 = sadd.s32 %s17, %s18
      %s187 = smul.u32 4, %s186
      %p188 = scmp.lt.s32.totalorder %s17, 1
      %s189 = scalar_select %p188, %s17, 1
      %s190 = smul.addr %s189, 8
      %s191 = scalar_lea.vmem %s2, %s190
      %v192 = vld [vmem:[%s177] sm:$0xff]
      %s194 = ssub.s32 256, 1
      %195 = vst [vmem:[#allocation2] sm:%s194] %v192
      %s196 = scalar_lea.vmem %s177, 8
      %v197 = vld [vmem:[%s196] sm:$0xff]
      %s198 = scalar_lea.vmem [#allocation2], 8
      %s200 = ssub.s32 256, 1
      %201 = vst [vmem:[%s198] sm:%s200] %v197
      %s202 = scalar_lea.vmem %s177, 16
      %v203 = vld [vmem:[%s202] sm:$0xff]
      %s204 = scalar_lea.vmem [#allocation2], 16
      %s206 = ssub.s32 256, 1
      %207 = vst [vmem:[%s204] sm:%s206] %v203
      %s208 = scalar_lea.vmem %s177, 24
      %v209 = vld [vmem:[%s208] sm:$0xff]
      %s210 = scalar_lea.vmem [#allocation2], 24
      %s212 = ssub.s32 256, 1
      %213 = vst [vmem:[%s210] sm:%s212] %v209
      %s214 = scalar_lea.vmem %s177, 64
      %v215 = vld [vmem:[%s214] sm:$0xff]
      %s216 = scalar_lea.vmem [#allocation2], 32
      %s218 = ssub.s32 256, 1
      %219 = vst [vmem:[%s216] sm:%s218] %v215
      %s220 = scalar_lea.vmem %s177, 72
      %v221 = vld [vmem:[%s220] sm:$0xff]
      %s222 = scalar_lea.vmem [#allocation2], 40
      %s224 = ssub.s32 256, 1
      %225 = vst [vmem:[%s222] sm:%s224] %v221
      %s226 = scalar_lea.vmem %s177, 80
      %v227 = vld [vmem:[%s226] sm:$0xff]
      %s228 = scalar_lea.vmem [#allocation2], 48
      %s230 = ssub.s32 256, 1
      %231 = vst [vmem:[%s228] sm:%s230] %v227
      %s232 = scalar_lea.vmem %s177, 88
      %v233 = vld [vmem:[%s232] sm:$0xff]
      %s234 = scalar_lea.vmem [#allocation2], 56
      %s236 = ssub.s32 256, 1
      %237 = vst [vmem:[%s234] sm:%s236] %v233
      %s238 = scalar_lea.vmem %s177, 128
      %v239 = vld [vmem:[%s238] sm:$0xff]
      %s240 = scalar_lea.vmem [#allocation2], 64
      %s242 = ssub.s32 256, 1
      %243 = vst [vmem:[%s240] sm:%s242] %v239
      %s244 = scalar_lea.vmem %s177, 136
      %v245 = vld [vmem:[%s244] sm:$0xff]
      %s246 = scalar_lea.vmem [#allocation2], 72
      %s248 = ssub.s32 256, 1
      %249 = vst [vmem:[%s246] sm:%s248] %v245
      %s250 = scalar_lea.vmem %s177, 144
      %v251 = vld [vmem:[%s250] sm:$0xff]
      %s252 = scalar_lea.vmem [#allocation2], 80
      %s254 = ssub.s32 256, 1
      %255 = vst [vmem:[%s252] sm:%s254] %v251
      %s256 = scalar_lea.vmem %s177, 152
      %v257 = vld [vmem:[%s256] sm:$0xff]
      %s258 = scalar_lea.vmem [#allocation2], 88
      %s260 = ssub.s32 256, 1
      %261 = vst [vmem:[%s258] sm:%s260] %v257
      %s262 = scalar_lea.vmem %s177, 192
      %v263 = vld [vmem:[%s262] sm:$0xff]
      %s264 = scalar_lea.vmem [#allocation2], 96
      %s266 = ssub.s32 256, 1
      %267 = vst [vmem:[%s264] sm:%s266] %v263
      %s268 = scalar_lea.vmem %s177, 200
      %v269 = vld [vmem:[%s268] sm:$0xff]
      %s270 = scalar_lea.vmem [#allocation2], 104
      %s272 = ssub.s32 256, 1
      %273 = vst [vmem:[%s270] sm:%s272] %v269
      %s274 = scalar_lea.vmem %s177, 208
      %v275 = vld [vmem:[%s274] sm:$0xff]
      %s276 = scalar_lea.vmem [#allocation2], 112
      %s278 = ssub.s32 256, 1
      %279 = vst [vmem:[%s276] sm:%s278] %v275
      %s280 = scalar_lea.vmem %s177, 216
      %v281 = vld [vmem:[%s280] sm:$0xff]
      %s282 = scalar_lea.vmem [#allocation2], 120
      %s284 = ssub.s32 256, 1
      %285 = vst [vmem:[%s282] sm:%s284] %v281
      %s286 = scalar_lea.vmem %s177, 256
      %v287 = vld [vmem:[%s286] sm:$0xff]
      %s288 = scalar_lea.vmem [#allocation2], 128
      %s290 = ssub.s32 256, 1
      %291 = vst [vmem:[%s288] sm:%s290] %v287
      %s292 = scalar_lea.vmem %s177, 264
      %v293 = vld [vmem:[%s292] sm:$0xff]
      %s294 = scalar_lea.vmem [#allocation2], 136
      %s296 = ssub.s32 256, 1
      %297 = vst [vmem:[%s294] sm:%s296] %v293
      %s298 = scalar_lea.vmem %s177, 272
      %v299 = vld [vmem:[%s298] sm:$0xff]
      %s300 = scalar_lea.vmem [#allocation2], 144
      %s302 = ssub.s32 256, 1
      %303 = vst [vmem:[%s300] sm:%s302] %v299
      %s304 = scalar_lea.vmem %s177, 280
      %v305 = vld [vmem:[%s304] sm:$0xff]
      %s306 = scalar_lea.vmem [#allocation2], 152
      %s308 = ssub.s32 256, 1
      %309 = vst [vmem:[%s306] sm:%s308] %v305
      %s310 = scalar_lea.vmem %s177, 320
      %v311 = vld [vmem:[%s310] sm:$0xff]
      %s312 = scalar_lea.vmem [#allocation2], 160
      %s314 = ssub.s32 256, 1
      %315 = vst [vmem:[%s312] sm:%s314] %v311
      %s316 = scalar_lea.vmem %s177, 328
      %v317 = vld [vmem:[%s316] sm:$0xff]
      %s318 = scalar_lea.vmem [#allocation2], 168
      %s320 = ssub.s32 256, 1
      %321 = vst [vmem:[%s318] sm:%s320] %v317
      %s322 = scalar_lea.vmem %s177, 336
      %v323 = vld [vmem:[%s322] sm:$0xff]
      %s324 = scalar_lea.vmem [#allocation2], 176
      %s326 = ssub.s32 256, 1
      %327 = vst [vmem:[%s324] sm:%s326] %v323
      %s328 = scalar_lea.vmem %s177, 344
      %v329 = vld [vmem:[%s328] sm:$0xff]
      %s330 = scalar_lea.vmem [#allocation2], 184
      %s332 = ssub.s32 256, 1
      %333 = vst [vmem:[%s330] sm:%s332] %v329
      %v334 = vld [vmem:[%s185] sm:$0xff]
      %s336 = ssub.s32 256, 1
      %337 = vst [vmem:[#allocation3] sm:%s336] %v334
      %s338 = scalar_lea.vmem %s185, 8
      %v339 = vld [vmem:[%s338] sm:$0xff]
      %s340 = scalar_lea.vmem [#allocation3], 8
      %s342 = ssub.s32 256, 1
      %343 = vst [vmem:[%s340] sm:%s342] %v339
      %s344 = scalar_lea.vmem %s185, 16
      %v345 = vld [vmem:[%s344] sm:$0xff]
      %s346 = scalar_lea.vmem [#allocation3], 16
      %s348 = ssub.s32 256, 1
      %349 = vst [vmem:[%s346] sm:%s348] %v345
      %s350 = scalar_lea.vmem %s185, 24
      %v351 = vld [vmem:[%s350] sm:$0xff]
      %s352 = scalar_lea.vmem [#allocation3], 24
      %s354 = ssub.s32 256, 1
      %355 = vst [vmem:[%s352] sm:%s354] %v351
      %s356 = scalar_lea.vmem %s185, 64
      %v357 = vld [vmem:[%s356] sm:$0xff]
      %s358 = scalar_lea.vmem [#allocation3], 32
      %s360 = ssub.s32 256, 1
      %361 = vst [vmem:[%s358] sm:%s360] %v357
      %s362 = scalar_lea.vmem %s185, 72
      %v363 = vld [vmem:[%s362] sm:$0xff]
      %s364 = scalar_lea.vmem [#allocation3], 40
      %s366 = ssub.s32 256, 1
      %367 = vst [vmem:[%s364] sm:%s366] %v363
      %s368 = scalar_lea.vmem %s185, 80
      %v369 = vld [vmem:[%s368] sm:$0xff]
      %s370 = scalar_lea.vmem [#allocation3], 48
      %s372 = ssub.s32 256, 1
      %373 = vst [vmem:[%s370] sm:%s372] %v369
      %s374 = scalar_lea.vmem %s185, 88
      %v375 = vld [vmem:[%s374] sm:$0xff]
      %s376 = scalar_lea.vmem [#allocation3], 56
      %s378 = ssub.s32 256, 1
      %379 = vst [vmem:[%s376] sm:%s378] %v375
      %s380 = scalar_lea.vmem %s185, 128
      %v381 = vld [vmem:[%s380] sm:$0xff]
      %s382 = scalar_lea.vmem [#allocation3], 64
      %s384 = ssub.s32 256, 1
      %385 = vst [vmem:[%s382] sm:%s384] %v381
      %s386 = scalar_lea.vmem %s185, 136
      %v387 = vld [vmem:[%s386] sm:$0xff]
      %s388 = scalar_lea.vmem [#allocation3], 72
      %s390 = ssub.s32 256, 1
      %391 = vst [vmem:[%s388] sm:%s390] %v387
      %s392 = scalar_lea.vmem %s185, 144
      %v393 = vld [vmem:[%s392] sm:$0xff]
      %s394 = scalar_lea.vmem [#allocation3], 80
      %s396 = ssub.s32 256, 1
      %397 = vst [vmem:[%s394] sm:%s396] %v393
      %s398 = scalar_lea.vmem %s185, 152
      %v399 = vld [vmem:[%s398] sm:$0xff]
      %s400 = scalar_lea.vmem [#allocation3], 88
      %s402 = ssub.s32 256, 1
      %403 = vst [vmem:[%s400] sm:%s402] %v399
      %s404 = scalar_lea.vmem %s185, 192
      %v405 = vld [vmem:[%s404] sm:$0xff]
      %s406 = scalar_lea.vmem [#allocation3], 96
      %s408 = ssub.s32 256, 1
      %409 = vst [vmem:[%s406] sm:%s408] %v405
      %s410 = scalar_lea.vmem %s185, 200
      %v411 = vld [vmem:[%s410] sm:$0xff]
      %s412 = scalar_lea.vmem [#allocation3], 104
      %s414 = ssub.s32 256, 1
      %415 = vst [vmem:[%s412] sm:%s414] %v411
      %s416 = scalar_lea.vmem %s185, 208
      %v417 = vld [vmem:[%s416] sm:$0xff]
      %s418 = scalar_lea.vmem [#allocation3], 112
      %s420 = ssub.s32 256, 1
      %421 = vst [vmem:[%s418] sm:%s420] %v417
      %s422 = scalar_lea.vmem %s185, 216
      %v423 = vld [vmem:[%s422] sm:$0xff]
      %s424 = scalar_lea.vmem [#allocation3], 120
      %s426 = ssub.s32 256, 1
      %427 = vst [vmem:[%s424] sm:%s426] %v423
      %s428 = scalar_lea.vmem %s185, 256
      %v429 = vld [vmem:[%s428] sm:$0xff]
      %s430 = scalar_lea.vmem [#allocation3], 128
      %s432 = ssub.s32 256, 1
      %433 = vst [vmem:[%s430] sm:%s432] %v429
      %s434 = scalar_lea.vmem %s185, 264
      %v435 = vld [vmem:[%s434] sm:$0xff]
      %s436 = scalar_lea.vmem [#allocation3], 136
      %s438 = ssub.s32 256, 1
      %439 = vst [vmem:[%s436] sm:%s438] %v435
      %s440 = scalar_lea.vmem %s185, 272
      %v441 = vld [vmem:[%s440] sm:$0xff]
      %s442 = scalar_lea.vmem [#allocation3], 144
      %s444 = ssub.s32 256, 1
      %445 = vst [vmem:[%s442] sm:%s444] %v441
      %s446 = scalar_lea.vmem %s185, 280
      %v447 = vld [vmem:[%s446] sm:$0xff]
      %s448 = scalar_lea.vmem [#allocation3], 152
      %s450 = ssub.s32 256, 1
      %451 = vst [vmem:[%s448] sm:%s450] %v447
      %s452 = scalar_lea.vmem %s185, 320
      %v453 = vld [vmem:[%s452] sm:$0xff]
      %s454 = scalar_lea.vmem [#allocation3], 160
      %s456 = ssub.s32 256, 1
      %457 = vst [vmem:[%s454] sm:%s456] %v453
      %s458 = scalar_lea.vmem %s185, 328
      %v459 = vld [vmem:[%s458] sm:$0xff]
      %s460 = scalar_lea.vmem [#allocation3], 168
      %s462 = ssub.s32 256, 1
      %463 = vst [vmem:[%s460] sm:%s462] %v459
      %s464 = scalar_lea.vmem %s185, 336
      %v465 = vld [vmem:[%s464] sm:$0xff]
      %s466 = scalar_lea.vmem [#allocation3], 176
      %s468 = ssub.s32 256, 1
      %469 = vst [vmem:[%s466] sm:%s468] %v465
      %s470 = scalar_lea.vmem %s185, 344
      %v471 = vld [vmem:[%s470] sm:$0xff]
      %s472 = scalar_lea.vmem [#allocation3], 184
      %s474 = ssub.s32 256, 1
      %475 = vst [vmem:[%s472] sm:%s474] %v471
      %p476 = scmp.eq.s32.totalorder %s18, 0
      // Predicated region
      $region29: #{axis_aligned_iou_loss2.2} parent=27 // pred_check
        %p477 = pneg %p476
      $region30: #{axis_aligned_iou_loss2.2} parent=27 // pred_check_branch
        %479 = sbr.rel (%p477) target = $region32
      $region31: #{axis_aligned_iou_loss2.2} parent=27 // pred_region
        %480 = vst [vmem:[%s191] sm:$0xff] 0.0
      $region32: #{axis_aligned_iou_loss2.2} parent=27 // pred_fallthru
        _
      %v481 = vld [vmem:[#allocation2] sm:$0xff]
      %v482 = vld [vmem:[#allocation2 + $0x8] sm:$0xff]
      %v483 = vld [vmem:[#allocation2 + $0x10] sm:$0xff]
      %v484 = vld [vmem:[#allocation2 + $0x18] sm:$0xff]
      %s485 = scalar_lea.vmem [#allocation2], 32
      %v486 = vld [vmem:[%s485] sm:$0xff]
      %v487 = vld [vmem:[%s485 + $0x8] sm:$0xff]
      %v488 = vld [vmem:[%s485 + $0x10] sm:$0xff]
      %v489 = vld [vmem:[%s485 + $0x18] sm:$0xff]
      %s490 = scalar_lea.vmem [#allocation2], 64
      %v491 = vld [vmem:[%s490] sm:$0xff]
      %v492 = vld [vmem:[%s490 + $0x8] sm:$0xff]
      %v493 = vld [vmem:[%s490 + $0x10] sm:$0xff]
      %v494 = vld [vmem:[%s490 + $0x18] sm:$0xff]
      %s495 = scalar_lea.vmem [#allocation2], 96
      %v496 = vld [vmem:[%s495] sm:$0xff]
      %v497 = vld [vmem:[%s495 + $0x8] sm:$0xff]
      %v498 = vld [vmem:[%s495 + $0x10] sm:$0xff]
      %v499 = vld [vmem:[%s495 + $0x18] sm:$0xff]
      %s500 = scalar_lea.vmem [#allocation2], 128
      %v501 = vld [vmem:[%s500] sm:$0xff]
      %v502 = vld [vmem:[%s500 + $0x8] sm:$0xff]
      %v503 = vld [vmem:[%s500 + $0x10] sm:$0xff]
      %v504 = vld [vmem:[%s500 + $0x18] sm:$0xff]
      %s505 = scalar_lea.vmem [#allocation2], 160
      %v506 = vld [vmem:[%s505] sm:$0xff]
      %v507 = vld [vmem:[%s505 + $0x8] sm:$0xff]
      %v508 = vld [vmem:[%s505 + $0x10] sm:$0xff]
      %v509 = vld [vmem:[%s505 + $0x18] sm:$0xff]
      %v510 = vld [vmem:[#allocation3] sm:$0xff]
      %v511 = vld [vmem:[#allocation3 + $0x8] sm:$0xff]
      %v512 = vld [vmem:[#allocation3 + $0x10] sm:$0xff]
      %v513 = vld [vmem:[#allocation3 + $0x18] sm:$0xff]
      %s514 = scalar_lea.vmem [#allocation3], 32
      %v515 = vld [vmem:[%s514] sm:$0xff]
      %v516 = vld [vmem:[%s514 + $0x8] sm:$0xff]
      %v517 = vld [vmem:[%s514 + $0x10] sm:$0xff]
      %v518 = vld [vmem:[%s514 + $0x18] sm:$0xff]
      %s519 = scalar_lea.vmem [#allocation3], 64
      %v520 = vld [vmem:[%s519] sm:$0xff]
      %v521 = vld [vmem:[%s519 + $0x8] sm:$0xff]
      %v522 = vld [vmem:[%s519 + $0x10] sm:$0xff]
      %v523 = vld [vmem:[%s519 + $0x18] sm:$0xff]
      %s524 = scalar_lea.vmem [#allocation3], 96
      %v525 = vld [vmem:[%s524] sm:$0xff]
      %v526 = vld [vmem:[%s524 + $0x8] sm:$0xff]
      %v527 = vld [vmem:[%s524 + $0x10] sm:$0xff]
      %v528 = vld [vmem:[%s524 + $0x18] sm:$0xff]
      %s529 = scalar_lea.vmem [#allocation3], 128
      %v530 = vld [vmem:[%s529] sm:$0xff]
      %v531 = vld [vmem:[%s529 + $0x8] sm:$0xff]
      %v532 = vld [vmem:[%s529 + $0x10] sm:$0xff]
      %v533 = vld [vmem:[%s529 + $0x18] sm:$0xff]
      %s534 = scalar_lea.vmem [#allocation3], 160
      %v535 = vld [vmem:[%s534] sm:$0xff]
      %v536 = vld [vmem:[%s534 + $0x8] sm:$0xff]
      %v537 = vld [vmem:[%s534 + $0x10] sm:$0xff]
      %v538 = vld [vmem:[%s534 + $0x18] sm:$0xff]
      %v539 = vsub.f32 %v496, %v481
      %v540 = vsub.f32 %v497, %v482
      %v541 = vsub.f32 %v498, %v483
      %v542 = vsub.f32 %v499, %v484
      %v543 = vsub.f32 %v501, %v486
      %v544 = vsub.f32 %v502, %v487
      %v545 = vsub.f32 %v503, %v488
      %v546 = vsub.f32 %v504, %v489
      %v547 = vmul.f32 %v539, %v543
      %v548 = vmul.f32 %v540, %v544
      %v549 = vmul.f32 %v541, %v545
      %v550 = vmul.f32 %v542, %v546
      %v551 = vsub.f32 %v506, %v491
      %v552 = vsub.f32 %v507, %v492
      %v553 = vsub.f32 %v508, %v493
      %v554 = vsub.f32 %v509, %v494
      %v555 = vmul.f32 %v547, %v551
      %v556 = vmul.f32 %v548, %v552
      %v557 = vmul.f32 %v549, %v553
      %v558 = vmul.f32 %v550, %v554
      %v559 = vsub.f32 %v525, %v510
      %v560 = vsub.f32 %v526, %v511
      %v561 = vsub.f32 %v527, %v512
      %v562 = vsub.f32 %v528, %v513
      %v563 = vsub.f32 %v530, %v515
      %v564 = vsub.f32 %v531, %v516
      %v565 = vsub.f32 %v532, %v517
      %v566 = vsub.f32 %v533, %v518
      %v567 = vmul.f32 %v559, %v563
      %v568 = vmul.f32 %v560, %v564
      %v569 = vmul.f32 %v561, %v565
      %v570 = vmul.f32 %v562, %v566
      %v571 = vsub.f32 %v535, %v520
      %v572 = vsub.f32 %v536, %v521
      %v573 = vsub.f32 %v537, %v522
      %v574 = vsub.f32 %v538, %v523
      %v575 = vmul.f32 %v567, %v571
      %v576 = vmul.f32 %v568, %v572
      %v577 = vmul.f32 %v569, %v573
      %v578 = vmul.f32 %v570, %v574
      %v579 = vmin.f32 %v496, %v525
      %v580 = vmin.f32 %v497, %v526
      %v581 = vmin.f32 %v498, %v527
      %v582 = vmin.f32 %v499, %v528
      %v583 = vmax.f32 %v481, %v510
      %v584 = vmax.f32 %v482, %v511
      %v585 = vmax.f32 %v483, %v512
      %v586 = vmax.f32 %v484, %v513
      %v587 = vsub.f32 %v579, %v583
      %v588 = vsub.f32 %v580, %v584
      %v589 = vsub.f32 %v581, %v585
      %v590 = vsub.f32 %v582, %v586
      %v591 = vmax.f32 %v587, 0.0
      %v592 = vmax.f32 %v588, 0.0
      %v593 = vmax.f32 %v589, 0.0
      %v594 = vmax.f32 %v590, 0.0
      %v595 = vmin.f32 %v501, %v530
      %v596 = vmin.f32 %v502, %v531
      %v597 = vmin.f32 %v503, %v532
      %v598 = vmin.f32 %v504, %v533
      %v599 = vmax.f32 %v486, %v515
      %v600 = vmax.f32 %v487, %v516
      %v601 = vmax.f32 %v488, %v517
      %v602 = vmax.f32 %v489, %v518
      %v603 = vsub.f32 %v595, %v599
      %v604 = vsub.f32 %v596, %v600
      %v605 = vsub.f32 %v597, %v601
      %v606 = vsub.f32 %v598, %v602
      %v607 = vmax.f32 %v603, 0.0
      %v608 = vmax.f32 %v604, 0.0
      %v609 = vmax.f32 %v605, 0.0
      %v610 = vmax.f32 %v606, 0.0
      %v611 = vmin.f32 %v506, %v535
      %v612 = vmin.f32 %v507, %v536
      %v613 = vmin.f32 %v508, %v537
      %v614 = vmin.f32 %v509, %v538
      %v615 = vmax.f32 %v491, %v520
      %v616 = vmax.f32 %v492, %v521
      %v617 = vmax.f32 %v493, %v522
      %v618 = vmax.f32 %v494, %v523
      %v619 = vsub.f32 %v611, %v615
      %v620 = vsub.f32 %v612, %v616
      %v621 = vsub.f32 %v613, %v617
      %v622 = vsub.f32 %v614, %v618
      %v623 = vmax.f32 %v619, 0.0
      %v624 = vmax.f32 %v620, 0.0
      %v625 = vmax.f32 %v621, 0.0
      %v626 = vmax.f32 %v622, 0.0
      %v627 = vmul.f32 %v591, %v607
      %v628 = vmul.f32 %v592, %v608
      %v629 = vmul.f32 %v593, %v609
      %v630 = vmul.f32 %v594, %v610
      %v631 = vmul.f32 %v627, %v623
      %v632 = vmul.f32 %v628, %v624
      %v633 = vmul.f32 %v629, %v625
      %v634 = vmul.f32 %v630, %v626
      %v635 = vadd.f32 %v555, %v575
      %v636 = vadd.f32 %v556, %v576
      %v637 = vadd.f32 %v557, %v577
      %v638 = vadd.f32 %v558, %v578
      %v639 = vsub.f32 %v635, %v631
      %v640 = vsub.f32 %v636, %v632
      %v641 = vsub.f32 %v637, %v633
      %v642 = vsub.f32 %v638, %v634
      %v643 = vmax.f32 %v639, 1e-06
      %v644 = vmax.f32 %v640, 1e-06
      %v645 = vmax.f32 %v641, 1e-06
      %v646 = vmax.f32 %v642, 1e-06
      %v647 = vrcp.pop %v643
      %v648 = vmul.f32 %v631, %v647
      %v649 = vrcp.pop %v644
      %v650 = vmul.f32 %v632, %v649
      %v651 = vrcp.pop %v645
      %v652 = vmul.f32 %v633, %v651
      %v653 = vrcp.pop %v646
      %v654 = vmul.f32 %v634, %v653
      %v655 = vsub.f32 1.0, %v648
      %v656 = vsub.f32 1.0, %v650
      %v657 = vsub.f32 1.0, %v652
      %v658 = vsub.f32 1.0, %v654
      %v659 = vadd.f32 %v655, %v656
      %v660 = vadd.f32 %v659, %v657
      %v661 = vadd.f32 %v660, %v658
      %v662 = vld [vmem:[%s191] sm:$0xff]
      %v663 = vadd.f32 %v662, %v661
      %664 = vst [vmem:[%s191] sm:$0xff] %v663
      %p665 = scmp.lt.s32.totalorder %s17, 1
      %s666 = scalar_select %p665, %s17, 1
      %s667 = smul.addr %s666, 8
      %s668 = scalar_lea.vmem %s2, %s667
      // Predicated region
      $region33: #{axis_aligned_iou_loss2.2} parent=27 // pred_check
        %p669 = pneg %p99
      $region34: #{axis_aligned_iou_loss2.2} parent=27 // pred_check_branch
        %671 = sbr.rel (%p669) target = $region36
      $region35: #{axis_aligned_iou_loss2.2} parent=27 // pred_region
        _
      $region36: #{axis_aligned_iou_loss2.2} parent=27 // pred_fallthru
        _
    $region28: #{axis_aligned_iou_loss2.2} parent=5 // pred_fallthru
      _
    %p672 = scmp.le.s32.totalorder 2, %s8
    // Predicated region
    $region37: #{axis_aligned_iou_loss2.2} parent=5 // pred_check
      %p673 = pneg %p672
    $region38: #{axis_aligned_iou_loss2.2} parent=5 // pred_check_branch
      %675 = sbr.rel (%p673) target = $region40
    $region39: #{axis_aligned_iou_loss2.2} parent=5 // pred_region
      %s676 = ssub.s32 %s8, 2
      // Predicated region
      $region41: #{axis_aligned_iou_loss2.2} parent=39 // pred_check
        %p677 = pneg %p105
      $region42: #{axis_aligned_iou_loss2.2} parent=39 // pred_check_branch
        %679 = sbr.rel (%p677) target = $region44
      $region43: #{axis_aligned_iou_loss2.2} parent=39 // pred_region
        %p680 = scmp.lt.s32.totalorder %s19, 1
        %s681 = scalar_select %p680, %s19, 1
        %s682 = smul.addr %s681, 8
        %s683 = scalar_lea.vmem %s2, %s682
      $region44: #{axis_aligned_iou_loss2.2} parent=39 // pred_fallthru
        _
    $region40: #{axis_aligned_iou_loss2.2} parent=5 // pred_fallthru
      _
  $region6: #{axis_aligned_iou_loss2.2} parent=0 // loop_footer
    %s12 = sadd.s32 1, %s8
  $region7: #{axis_aligned_iou_loss2.2} parent=0 // loop_footer_branch
    %7 = sbr.rel target = $region3
  $region8: #{axis_aligned_iou_loss2.2} parent=0 // loop_exit
    _

</llo_original>
